<compile_context>
chip_gen: v5e
topology: v5e:2x2
jax: 0.10.0
libtpu: 0.0.40
codegen_flags: <defaults>
</compile_context>

<pallas_src>
import math

import jax
import jax.numpy as jnp
from jax.experimental import pallas as pl
from jax.experimental.pallas import tpu as pltpu

_LOG_2PI = math.log(2.0 * math.pi)


# ----------------------------------------------------------------------------
# Fused kernel: estimator forward + Gaussian NLL + weight-prior log-prob
# + final combine.  Single grid point; everything fits in VMEM at these sizes.
# ----------------------------------------------------------------------------
def _bayesian_loss_kernel(consts_ref,                       # SMEM scalars
                          theta_ref, x_ref,                 # data
                          w1_ref, b1_ref, w2_ref, b2_ref,   # estimator params
                          out_ref):                         # (1,1) SMEM loss
    x = x_ref[...].astype(jnp.float32)
    theta = theta_ref[...].astype(jnp.float32)
    w1 = w1_ref[...].astype(jnp.float32)
    b1 = b1_ref[...].astype(jnp.float32)
    w2 = w2_ref[...].astype(jnp.float32)
    b2 = b2_ref[...].astype(jnp.float32)

    # ---- estimator forward (MXU matmuls, VPU relu) ----
    h = jnp.dot(x, w1, preferred_element_type=jnp.float32) + b1
    h = jnp.maximum(h, 0.0)

    # single merged head matmul -> (B, 2*Dt); static column slices split it.
    head = jnp.dot(h, w2, preferred_element_type=jnp.float32) + b2
    dt = theta.shape[1]
    mu = head[:, :dt]
    log_sigma = head[:, dt:]

    # ---- Gaussian NLL, mean over batch (exp stays on the EUP slot) ----
    inv_var = jnp.exp(-2.0 * log_sigma)
    diff = theta - mu
    nll = 0.5 * (diff * diff * inv_var + 2.0 * log_sigma + jnp.float32(_LOG_2PI))
    lik_loss = jnp.sum(nll) / jnp.float32(theta.shape[0])

    # ---- Gaussian weight-prior log-prob from the already-resident refs ----
    sumsq = (jnp.sum(w1 * w1) + jnp.sum(b1 * b1)
             + jnp.sum(w2 * w2) + jnp.sum(b2 * b2))

    n_train = consts_ref[0]       # float(n_train)
    inv_sigma2 = consts_ref[1]    # 1 / sigma^2
    n_params = consts_ref[2]      # float(total #params)
    log_norm = consts_ref[3]      # log(2*pi*sigma^2)

    prior_log_prob = -0.5 * sumsq * inv_sigma2 - 0.5 * n_params * log_norm

    # ---- forward(): lik_loss * n_train + (-prior_log_prob) ----
    out_ref[0, 0] = lik_loss * n_train - prior_log_prob


def bayesian_loss(theta, x, params, *, n_train, prior_sigma=1.0):
    """Single fused pallas_call computing the BayesianLoss forward pass."""
    w1, b1, w2, b2 = params
    n_params = sum(int(p.size) for p in params)
    sigma2 = float(prior_sigma) * float(prior_sigma)
    consts = jnp.array(
        [float(n_train), 1.0 / sigma2, float(n_params),
         math.log(2.0 * math.pi * sigma2)],
        dtype=jnp.float32)

    out = pl.pallas_call(
        _bayesian_loss_kernel,
        out_shape=jax.ShapeDtypeStruct((1, 1), jnp.float32),
        in_specs=[pl.BlockSpec(memory_space=pltpu.MemorySpace.SMEM)]
        + [pl.BlockSpec(memory_space=pltpu.MemorySpace.VMEM)] * 6,
        out_specs=pl.BlockSpec(memory_space=pltpu.MemorySpace.SMEM),
    )(consts, theta, x, w1, b1, w2, b2)
    return out[0, 0]


# ----------------------------------------------------------------------------
# Pure-JAX reference (sanity check of the kernel math).
# ----------------------------------------------------------------------------
def bayesian_loss_ref(theta, x, params, *, n_train, prior_sigma=1.0):
    w1, b1, w2, b2 = params
    dt = theta.shape[1]
    h = jnp.maximum(x @ w1 + b1, 0.0)
    head = h @ w2 + b2
    mu, log_sigma = head[:, :dt], head[:, dt:]
    nll = 0.5 * ((theta - mu) ** 2 * jnp.exp(-2.0 * log_sigma)
                 + 2.0 * log_sigma + _LOG_2PI)
    lik_loss = jnp.mean(jnp.sum(nll, axis=-1))
    sigma2 = prior_sigma ** 2
    n_params = sum(p.size for p in params)
    sumsq = sum(jnp.sum(p.astype(jnp.float32) ** 2) for p in params)
    prior_log_prob = (-0.5 * sumsq / sigma2
                      - 0.5 * n_params * math.log(2.0 * math.pi * sigma2))
    return lik_loss * n_train + (-prior_log_prob)


if __name__ == "__main__":
    B, Dx, Dt, H = 8, 16, 4, 32
    n_train = 1000

    key = jax.random.PRNGKey(0)
    k = jax.random.split(key, 8)

    # deterministic synthetic estimator parameters (MLP head, merged mu||log_sigma)
    w1 = 0.1 * jax.random.normal(k[0], (Dx, H), jnp.float32)
    b1 = jnp.zeros((1, H), jnp.float32)
    w2 = 0.1 * jax.random.normal(k[1], (H, 2 * Dt), jnp.float32)
    b2 = jnp.zeros((1, 2 * Dt), jnp.float32)
    params = (w1, b1, w2, b2)

    # example inputs
    theta = jax.random.normal(k[3], (B, Dt), jnp.float32)
    x = jax.random.normal(k[4], (B, Dx), jnp.float32)

    loss = bayesian_loss(theta, x, params, n_train=n_train)
    loss = jax.block_until_ready(loss)

    ref = bayesian_loss_ref(theta, x, params, n_train=n_train)
    assert jnp.allclose(loss, ref, rtol=1e-2, atol=1e-2), (loss, ref)

    print("KERNEL_OK")
</pallas_src>

<mosaic_0001>
module attributes {stable_mosaic.version = 11 : i64} {
  func.func @_bayesian_loss_kernel(%arg0: memref<4xf32, #tpu.memory_space<smem>>, %arg1: memref<8x4xf32, #tpu.memory_space<vmem>>, %arg2: memref<8x16xf32, #tpu.memory_space<vmem>>, %arg3: memref<16x32xf32, #tpu.memory_space<vmem>>, %arg4: memref<1x32xf32, #tpu.memory_space<vmem>>, %arg5: memref<32x8xf32, #tpu.memory_space<vmem>>, %arg6: memref<1x8xf32, #tpu.memory_space<vmem>>, %arg7: memref<1x1xf32, #tpu.memory_space<smem>>) attributes {dimension_semantics = [], scalar_prefetch = 0 : i64, scratch_operands = 0 : i64, tpu.core_type = #tpu.core_type<tc>} {
    %c0 = arith.constant 0 : index
    %c0_0 = arith.constant 0 : index
    %0 = vector.load %arg2[%c0, %c0_0] : memref<8x16xf32, #tpu.memory_space<vmem>>, vector<8x16xf32>
    %c0_1 = arith.constant 0 : index
    %c0_2 = arith.constant 0 : index
    %1 = vector.load %arg1[%c0_1, %c0_2] : memref<8x4xf32, #tpu.memory_space<vmem>>, vector<8x4xf32>
    %c0_3 = arith.constant 0 : index
    %c0_4 = arith.constant 0 : index
    %2 = vector.load %arg3[%c0_3, %c0_4] : memref<16x32xf32, #tpu.memory_space<vmem>>, vector<16x32xf32>
    %c0_5 = arith.constant 0 : index
    %c0_6 = arith.constant 0 : index
    %3 = vector.load %arg4[%c0_5, %c0_6] : memref<1x32xf32, #tpu.memory_space<vmem>>, vector<1x32xf32>
    %c0_7 = arith.constant 0 : index
    %c0_8 = arith.constant 0 : index
    %4 = vector.load %arg5[%c0_7, %c0_8] : memref<32x8xf32, #tpu.memory_space<vmem>>, vector<32x8xf32>
    %c0_9 = arith.constant 0 : index
    %c0_10 = arith.constant 0 : index
    %5 = vector.load %arg6[%c0_9, %c0_10] : memref<1x8xf32, #tpu.memory_space<vmem>>, vector<1x8xf32>
    %cst = arith.constant dense<0.000000e+00> : vector<8x32xf32>
    %6 = tpu.matmul %0, %2, %cst {dimension_numbers = #tpu.dot_dimension_numbers<[1], [0], [0], [1], [0, 0, 1, 1], [], []>} : vector<8x16xf32>, vector<16x32xf32>, vector<8x32xf32> -> vector<8x32xf32>
    %7 = vector.broadcast %3 : vector<1x32xf32> to vector<8x32xf32>
    %8 = arith.addf %6, %7 : vector<8x32xf32>
    %cst_11 = arith.constant 0.000000e+00 : f32
    %9 = vector.broadcast %cst_11 : f32 to vector<8x32xf32>
    %10 = arith.maximumf %8, %9 : vector<8x32xf32>
    %cst_12 = arith.constant dense<0.000000e+00> : vector<8x8xf32>
    %11 = tpu.matmul %10, %4, %cst_12 {dimension_numbers = #tpu.dot_dimension_numbers<[1], [0], [0], [1], [0, 0, 1, 1], [], []>} : vector<8x32xf32>, vector<32x8xf32>, vector<8x8xf32> -> vector<8x8xf32>
    %12 = vector.broadcast %5 : vector<1x8xf32> to vector<8x8xf32>
    %13 = arith.addf %11, %12 : vector<8x8xf32>
    %14 = vector.extract_strided_slice %13 {offsets = [0, 0], sizes = [8, 4], strides = [1, 1]} : vector<8x8xf32> to vector<8x4xf32>
    %15 = vector.extract_strided_slice %13 {offsets = [0, 4], sizes = [8, 4], strides = [1, 1]} : vector<8x8xf32> to vector<8x4xf32>
    %cst_13 = arith.constant -2.000000e+00 : f32
    %16 = vector.broadcast %cst_13 : f32 to vector<8x4xf32>
    %17 = arith.mulf %16, %15 : vector<8x4xf32>
    %18 = math.exp %17 : vector<8x4xf32>
    %19 = arith.subf %1, %14 : vector<8x4xf32>
    %20 = arith.mulf %19, %19 : vector<8x4xf32>
    %21 = arith.mulf %20, %18 : vector<8x4xf32>
    %cst_14 = arith.constant 2.000000e+00 : f32
    %22 = vector.broadcast %cst_14 : f32 to vector<8x4xf32>
    %23 = arith.mulf %22, %15 : vector<8x4xf32>
    %24 = arith.addf %21, %23 : vector<8x4xf32>
    %cst_15 = arith.constant 1.83787704 : f32
    %25 = vector.broadcast %cst_15 : f32 to vector<8x4xf32>
    %26 = arith.addf %24, %25 : vector<8x4xf32>
    %cst_16 = arith.constant 5.000000e-01 : f32
    %27 = vector.broadcast %cst_16 : f32 to vector<8x4xf32>
    %28 = arith.mulf %27, %26 : vector<8x4xf32>
    %29 = vector.shape_cast %28 : vector<8x4xf32> to vector<1x8x4xf32>
    %cst_17 = arith.constant dense<0.000000e+00> : vector<1xf32>
    %30 = vector.multi_reduction <add>, %29, %cst_17 [1, 2] : vector<1x8x4xf32> to vector<1xf32>
    %31 = vector.shape_cast %30 : vector<1xf32> to vector<1x1x1xf32>
    %32 = vector.extract %31[0, 0, 0] : f32 from vector<1x1x1xf32>
    %cst_18 = arith.constant 8.000000e+00 : f32
    %33 = arith.divf %32, %cst_18 : f32
    %34 = arith.mulf %2, %2 : vector<16x32xf32>
    %35 = vector.shape_cast %34 : vector<16x32xf32> to vector<1x16x32xf32>
    %cst_19 = arith.constant dense<0.000000e+00> : vector<1xf32>
    %36 = vector.multi_reduction <add>, %35, %cst_19 [1, 2] : vector<1x16x32xf32> to vector<1xf32>
    %37 = vector.shape_cast %36 : vector<1xf32> to vector<1x1x1xf32>
    %38 = vector.extract %37[0, 0, 0] : f32 from vector<1x1x1xf32>
    %39 = arith.mulf %3, %3 : vector<1x32xf32>
    %40 = vector.shape_cast %39 : vector<1x32xf32> to vector<1x1x32xf32>
    %cst_20 = arith.constant dense<0.000000e+00> : vector<1xf32>
    %41 = vector.multi_reduction <add>, %40, %cst_20 [1, 2] : vector<1x1x32xf32> to vector<1xf32>
    %42 = vector.shape_cast %41 : vector<1xf32> to vector<1x1x1xf32>
    %43 = vector.extract %42[0, 0, 0] : f32 from vector<1x1x1xf32>
    %44 = arith.addf %38, %43 : f32
    %45 = arith.mulf %4, %4 : vector<32x8xf32>
    %46 = vector.shape_cast %45 : vector<32x8xf32> to vector<1x32x8xf32>
    %cst_21 = arith.constant dense<0.000000e+00> : vector<1xf32>
    %47 = vector.multi_reduction <add>, %46, %cst_21 [1, 2] : vector<1x32x8xf32> to vector<1xf32>
    %48 = vector.shape_cast %47 : vector<1xf32> to vector<1x1x1xf32>
    %49 = vector.extract %48[0, 0, 0] : f32 from vector<1x1x1xf32>
    %50 = arith.addf %44, %49 : f32
    %51 = arith.mulf %5, %5 : vector<1x8xf32>
    %52 = vector.shape_cast %51 : vector<1x8xf32> to vector<1x1x8xf32>
    %cst_22 = arith.constant dense<0.000000e+00> : vector<1xf32>
    %53 = vector.multi_reduction <add>, %52, %cst_22 [1, 2] : vector<1x1x8xf32> to vector<1xf32>
    %54 = vector.shape_cast %53 : vector<1xf32> to vector<1x1x1xf32>
    %55 = vector.extract %54[0, 0, 0] : f32 from vector<1x1x1xf32>
    %56 = arith.addf %50, %55 : f32
    %c0_23 = arith.constant 0 : index
    %57 = memref.load %arg0[%c0_23] : memref<4xf32, #tpu.memory_space<smem>>
    %c1 = arith.constant 1 : index
    %58 = memref.load %arg0[%c1] : memref<4xf32, #tpu.memory_space<smem>>
    %c2 = arith.constant 2 : index
    %59 = memref.load %arg0[%c2] : memref<4xf32, #tpu.memory_space<smem>>
    %c3 = arith.constant 3 : index
    %60 = memref.load %arg0[%c3] : memref<4xf32, #tpu.memory_space<smem>>
    %cst_24 = arith.constant -5.000000e-01 : f32
    %61 = arith.mulf %cst_24, %56 : f32
    %62 = arith.mulf %61, %58 : f32
    %cst_25 = arith.constant 5.000000e-01 : f32
    %63 = arith.mulf %cst_25, %59 : f32
    %64 = arith.mulf %63, %60 : f32
    %65 = arith.subf %62, %64 : f32
    %66 = arith.mulf %33, %57 : f32
    %67 = arith.subf %66, %65 : f32
    %c0_26 = arith.constant 0 : index
    %c0_27 = arith.constant 0 : index
    %68 = memref.load %arg7[%c0_26, %c0_27] : memref<1x1xf32, #tpu.memory_space<smem>>
    memref.store %67, %arg7[%c0_26, %c0_27] : memref<1x1xf32, #tpu.memory_space<smem>>
    return
  }
}

</mosaic_0001>

<llo_original>
// kernel: tpu_custom_call.1
$region0: #{tpu_custom_call.1}
  #allocation0 [shape = 'u32[]', space=smem, size = 0x4, offset = 0x4, fixed_abs, tag = 'smem constant byte address 0x4 - core index']
  #allocation1 [shape = 'u32[72,128]{1,0:T(1,128)}', space=vmem, size = 0x9000, scoped, tag = 'internal scratch']
  %s0 = inlined_call_operand.vmem [shape: f32[4], index: 0, kind: input, shape index: {}]
  %s1 = inlined_call_operand.vmem [shape: f32[8,4], index: 1, kind: input, shape index: {}]
  %s2 = inlined_call_operand.vmem [shape: f32[8,16], index: 2, kind: input, shape index: {}]
  %s3 = inlined_call_operand.vmem [shape: f32[16,32], index: 3, kind: input, shape index: {}]
  %s4 = inlined_call_operand.vmem [shape: f32[1,32], index: 4, kind: input, shape index: {}]
  %s5 = inlined_call_operand.vmem [shape: f32[32,8], index: 5, kind: input, shape index: {}]
  %s6 = inlined_call_operand.vmem [shape: f32[1,8], index: 6, kind: input, shape index: {}]
  %s7 = inlined_call_operand.hbm [shape: f32[1,1], index: 7, kind: output, shape index: {}]
  %s8 = sld [smem:[#allocation0]]
  $region42: #{tpu_custom_call.1} parent=0
    _
  %s10 = ssub.s32 1, %s8
  %s11 = scalar_select 0, %s10, %s8
  $region1: #{tpu_custom_call.1} parent=0
    #allocation2 [shape = 'u8[512]{0}', space=smem, size = 0x200, scoped, tag = 'input window, operand 0, single buffered']
    #allocation3 [shape = 's32[1]{0}', space=sflag, size = 0x4, scoped, tag = 'scoped memory for tpu_custom_call.1']
    #allocation4 [shape = 's32[1]{0}', space=sflag, size = 0x4, scoped, tag = 'scoped memory for tpu_custom_call.1']
    #allocation5 [shape = 'u8[512]{0}', space=smem, size = 0x200, scoped, tag = 'output window, operand 0, single buffered']
    %12 = vsyncpa [#allocation4], 0
    %13 = vsyncpa [#allocation3], 0
    // Predicated region
    $region2: #{tpu_custom_call.1} parent=1 // pred_check
      _
    $region3: #{tpu_custom_call.1} parent=1 // pred_check_branch
      %15 = sbr.rel (0) target = $region5
    $region4: #{tpu_custom_call.1} parent=1 // pred_region
      %17 = vsyncadd [#allocation4], 0
      %s19 = sshll.u32 %s0, 4
      %s20 = int_to_ptr.vmem [resolvable:$true] %s19
      %22 = dma.vmem_to_smem %s20, 16, [#allocation2], [#allocation4]
    $region5: #{tpu_custom_call.1} parent=1 // pred_fallthru
      _
    // Predicated region
    $region6: #{tpu_custom_call.1} parent=1 // pred_check
      _
    $region7: #{tpu_custom_call.1} parent=1 // pred_check_branch
      %24 = sbr.rel (0) target = $region9
    $region8: #{tpu_custom_call.1} parent=1 // pred_region
      _
    $region9: #{tpu_custom_call.1} parent=1 // pred_fallthru
      _
    // Predicated region
    $region10: #{tpu_custom_call.1} parent=1 // pred_check
      _
    $region11: #{tpu_custom_call.1} parent=1 // pred_check_branch
      %26 = sbr.rel (0) target = $region13
    $region12: #{tpu_custom_call.1} parent=1 // pred_region
      _
    $region13: #{tpu_custom_call.1} parent=1 // pred_fallthru
      _
    // Predicated region
    $region14: #{tpu_custom_call.1} parent=1 // pred_check
      _
    $region15: #{tpu_custom_call.1} parent=1 // pred_check_branch
      %28 = sbr.rel (0) target = $region17
    $region16: #{tpu_custom_call.1} parent=1 // pred_region
      _
    $region17: #{tpu_custom_call.1} parent=1 // pred_fallthru
      _
    // Predicated region
    $region18: #{tpu_custom_call.1} parent=1 // pred_check
      _
    $region19: #{tpu_custom_call.1} parent=1 // pred_check_branch
      %30 = sbr.rel (0) target = $region21
    $region20: #{tpu_custom_call.1} parent=1 // pred_region
      _
    $region21: #{tpu_custom_call.1} parent=1 // pred_fallthru
      _
    // Predicated region
    $region22: #{tpu_custom_call.1} parent=1 // pred_check
      _
    $region23: #{tpu_custom_call.1} parent=1 // pred_check_branch
      %32 = sbr.rel (0) target = $region25
    $region24: #{tpu_custom_call.1} parent=1 // pred_region
      _
    $region25: #{tpu_custom_call.1} parent=1 // pred_fallthru
      _
    // Predicated region
    $region26: #{tpu_custom_call.1} parent=1 // pred_check
      _
    $region27: #{tpu_custom_call.1} parent=1 // pred_check_branch
      %34 = sbr.rel (0) target = $region29
    $region28: #{tpu_custom_call.1} parent=1 // pred_region
      _
    $region29: #{tpu_custom_call.1} parent=1 // pred_fallthru
      _
    // Predicated region
    $region30: #{tpu_custom_call.1} parent=1 // pred_check
      _
    $region31: #{tpu_custom_call.1} parent=1 // pred_check_branch
      %36 = sbr.rel (0) target = $region33
    $region32: #{tpu_custom_call.1} parent=1 // pred_region
      %38 = dma.done [#allocation4], 16
    $region33: #{tpu_custom_call.1} parent=1 // pred_fallthru
      _
    %39 = sfence
    %v40 = vld [vmem:[%s2] sm:$0xff]
    %v41 = vld [vmem:[%s1] sm:$0xff]
    %v42 = vld [vmem:[%s3] sm:$0xff]
    %v43 = vld [vmem:[%s3 + $0x8] sm:$0xff]
    %v44 = vld [vmem:[%s4] sm:$0x1]
    %v45 = vld [vmem:[%s5] sm:$0xff]
    %v46 = vld [vmem:[%s5 + $0x8] sm:$0xff]
    %v47 = vld [vmem:[%s5 + $0x10] sm:$0xff]
    %v48 = vld [vmem:[%s5 + $0x18] sm:$0xff]
    %v49 = vld [vmem:[%s6] sm:$0x1]
    %v51 = vperm.slane %v44, 0
    %vm53 = vcmask 130048
    %v55 = vsel %vm53, %v40, 0
    %57 = vmatpush.msra.mxu0 0.0
    %58 = vmatpush.msra.mxu0 0.0
    %59 = vmatpush.msra.mxu0 0.0
    %60 = vmatpush.msra.mxu0 0.0
    %61 = vmatpush.msra.mxu0 0.0
    %62 = vmatpush.msra.mxu0 0.0
    %63 = vmatpush.msra.mxu0 0.0
    %64 = vmatpush.msra.mxu0 0.0
    %65 = vmatpush.msra.mxu0 0.0
    %66 = vmatpush.msra.mxu0 0.0
    %67 = vmatpush.msra.mxu0 0.0
    %68 = vmatpush.msra.mxu0 0.0
    %69 = vmatpush.msra.mxu0 0.0
    %70 = vmatpush.msra.mxu0 0.0
    %71 = vmatpush.msra.mxu0 %v43
    %72 = vmatpush.msra.mxu0 %v42
    %73 = vmatmul.f32.gmra.mxu0 %v55
    %v74 = vpop.f32.mrf.mxu0
    %v75 = vadd.f32 %v51, %v74
    %76 = vdwg.mxu0
    %v77 = vmax.f32 %v75, 0.0
    %v79 = vperm.slane %v49, 0
    %vm81 = vcmask 261120
    %v83 = vsel %vm81, %v77, 0
    %85 = vmatpush.msra.mxu0 0.0
    %86 = vmatpush.msra.mxu0 0.0
    %87 = vmatpush.msra.mxu0 0.0
    %88 = vmatpush.msra.mxu0 0.0
    %89 = vmatpush.msra.mxu0 0.0
    %90 = vmatpush.msra.mxu0 0.0
    %91 = vmatpush.msra.mxu0 0.0
    %92 = vmatpush.msra.mxu0 0.0
    %93 = vmatpush.msra.mxu0 0.0
    %94 = vmatpush.msra.mxu0 0.0
    %95 = vmatpush.msra.mxu0 0.0
    %96 = vmatpush.msra.mxu0 0.0
    %97 = vmatpush.msra.mxu0 %v48
    %98 = vmatpush.msra.mxu0 %v47
    %99 = vmatpush.msra.mxu0 %v46
    %100 = vmatpush.msra.mxu0 %v45
    %101 = vmatmul.f32.gmra.mxu0 %v83
    %v102 = vpop.f32.mrf.mxu0
    %v103 = vadd.f32 %v79, %v102
    %104 = vdwg.mxu0
    %v105 = vmul.f32 %v103, -2.0
    %v106 = vmul.f32 %v105, 1.442695
    %v107 = vpow.pop %v106
    %v108 = vsub.f32 %v41, %v103
    %v109 = vmul.f32 %v108, %v108
    %111 = vrot.lane.b32.xlu0 %v107, 124
    %v112 = vpop.permute.xlu0 %111
    %v114 = vmul.f32 %v109, %v112
    %v115 = vmul.f32 %v103, 2.0
    %117 = vrot.lane.b32.xlu0 %v115, 124
    %v118 = vpop.permute.xlu0 %117
    %v120 = vadd.f32 %v114, %v118
    %v121 = vadd.f32 %v120, 1.837877
    %v122 = vmul.f32 %v121, 0.5
    %vm123 = vcmask 31744
    %v124 = vsel %vm123, %v122, 0.0
    %125 = vadd.xlane.f32.xlu0 %v124
    %v126 = vpop.xlane.xlu0 %125
    %v127 = vrot.slane %v126, 4
    %v128 = vadd.f32 %v126, %v127
    %v129 = vrot.slane %v128, 2
    %v130 = vadd.f32 %v128, %v129
    %v131 = vrot.slane %v130, 1
    %v132 = vadd.f32 %v130, %v131
    %s133 = vtos %v132
    %v134 = vrcp.pop 8.0
    %v135 = vmul.f32 8.0, %v134
    %v136 = vsub.f32 1.0, %v135
    %v137 = vmul.f32 %v134, %v136
    %v138 = vadd.f32 %v134, %v137
    %vm139 = vweird.f32 %v134
    %v140 = vsel %vm139, %v134, %v138
    %s141 = vtos %v140
    %s142 = smul.f32 %s133, %s141
    %v143 = vmul.f32 %v42, %v42
    %v144 = vmul.f32 %v43, %v43
    %v145 = vsel %vm81, %v143, 0.0
    %v146 = vsel %vm81, %v144, 0.0
    %v147 = vadd.f32 %v145, %v146
    %148 = vadd.xlane.f32.xlu0 %v147
    %v149 = vpop.xlane.xlu0 %148
    %v150 = vrot.slane %v149, 4
    %v151 = vadd.f32 %v149, %v150
    %v152 = vrot.slane %v151, 2
    %v153 = vadd.f32 %v151, %v152
    %v154 = vrot.slane %v153, 1
    %v155 = vadd.f32 %v153, %v154
    %s156 = vtos %v155
    %v157 = vmul.f32 %v44, %v44
    %vm158 = vcmask 253952
    %v159 = vsel %vm158, %v157, 0.0
    %160 = vadd.xlane.f32.xlu0 %v159
    %v161 = vpop.xlane.xlu0 %160
    %v162 = vrot.slane %v161, 4
    %v163 = vadd.f32 %v161, %v162
    %v164 = vrot.slane %v163, 2
    %v165 = vadd.f32 %v163, %v164
    %v166 = vrot.slane %v165, 1
    %v167 = vadd.f32 %v165, %v166
    %s168 = vtos %v167
    %s169 = sadd.f32 %s156, %s168
    %v170 = vmul.f32 %v45, %v45
    %v171 = vmul.f32 %v46, %v46
    %v172 = vmul.f32 %v47, %v47
    %v173 = vmul.f32 %v48, %v48
    %vm174 = vcmask 64512
    %v175 = vsel %vm174, %v170, 0.0
    %v176 = vsel %vm174, %v171, 0.0
    %v177 = vadd.f32 %v175, %v176
    %v178 = vsel %vm174, %v172, 0.0
    %v179 = vadd.f32 %v177, %v178
    %v180 = vsel %vm174, %v173, 0.0
    %v181 = vadd.f32 %v179, %v180
    %182 = vadd.xlane.f32.xlu0 %v181
    %v183 = vpop.xlane.xlu0 %182
    %v184 = vrot.slane %v183, 4
    %v185 = vadd.f32 %v183, %v184
    %v186 = vrot.slane %v185, 2
    %v187 = vadd.f32 %v185, %v186
    %v188 = vrot.slane %v187, 1
    %v189 = vadd.f32 %v187, %v188
    %s190 = vtos %v189
    %s191 = sadd.f32 %s169, %s190
    %v192 = vmul.f32 %v49, %v49
    %vm193 = vcmask 57344
    %v194 = vsel %vm193, %v192, 0.0
    %195 = vadd.xlane.f32.xlu0 %v194
    %v196 = vpop.xlane.xlu0 %195
    %v197 = vrot.slane %v196, 4
    %v198 = vadd.f32 %v196, %v197
    %v199 = vrot.slane %v198, 2
    %v200 = vadd.f32 %v198, %v199
    %v201 = vrot.slane %v200, 1
    %v202 = vadd.f32 %v200, %v201
    %s203 = vtos %v202
    %s204 = sadd.f32 %s191, %s203
    %s205 = sld [smem:[#allocation2]]
    %s206 = sld [smem:[#allocation2 + $0x1]]
    %s207 = sld [smem:[#allocation2 + $0x2]]
    %s208 = sld [smem:[#allocation2 + $0x3]]
    %s209 = smul.f32 %s204, -0.5
    %s210 = smul.f32 %s209, %s206
    %s211 = smul.f32 %s207, 0.5
    %s212 = smul.f32 %s211, %s208
    %s213 = ssub.f32 %s210, %s212
    %s214 = smul.f32 %s142, %s205
    %s215 = ssub.f32 %s214, %s213
    %s216 = scalar_lea.smem [#allocation5], 0
    %217 = sst [smem:[%s216]] %s215
    // Predicated region
    $region34: #{tpu_custom_call.1} parent=1 // pred_check
      _
    $region35: #{tpu_custom_call.1} parent=1 // pred_check_branch
      %219 = sbr.rel (0) target = $region37
    $region36: #{tpu_custom_call.1} parent=1 // pred_region
      %221 = vsyncadd [#allocation3], 0
      %s223 = sshll.u32 %s7, 4
      %s224 = int_to_ptr.hbm [resolvable:$true] %s223
      %226 = dma.smem_to_hbm [#allocation5], 16, %s224, [#allocation3]
    $region37: #{tpu_custom_call.1} parent=1 // pred_fallthru
      _
    // Predicated region
    $region38: #{tpu_custom_call.1} parent=1 // pred_check
      _
    $region39: #{tpu_custom_call.1} parent=1 // pred_check_branch
      %228 = sbr.rel (0) target = $region41
    $region40: #{tpu_custom_call.1} parent=1 // pred_region
      %230 = dma.done [#allocation3], 16
    $region41: #{tpu_custom_call.1} parent=1 // pred_fallthru
      _
    %231 = sfence
    %232 = vsyncpa [#allocation3], 1
    %233 = vsyncpa [#allocation4], 1

</llo_original>
